<compile_context>
chip_gen: v7x
topology: tpu7x:2x2x1
jax: 0.10.0
libtpu: 0.0.40
codegen_flags: <defaults>
</compile_context>

<pallas_src>
import jax
import jax.numpy as jnp
from jax.experimental import pallas as pl
from jax.experimental.pallas import tpu as pltpu

_NEG_BIG = -1e30  # bias for padded logit columns; exp(_NEG_BIG - max) == 0.0 in f32


def _round_up(x: int, m: int) -> int:
    return ((x + m - 1) // m) * m


def ffnn_kernel(x_ref, w1_ref, b1_ref, w2_ref, b2_ref, o_ref):
    # x: (TM, D), w1: (D, H), b1: (1, H), w2: (H, Op), b2: (1, Op), o: (TM, Op)
    x = x_ref[...]

    # Hidden layer: Linear + ReLU (MXU matmul, f32 accumulate).
    h = jnp.dot(x, w1_ref[...], preferred_element_type=jnp.float32) + b1_ref[...]
    h = jnp.maximum(h, 0.0)

    # Output layer: Linear. Padded columns get logit == -1e30 (zero weights + big
    # negative bias) so they never win the max and contribute exactly 0 to the sum.
    logits = jnp.dot(h, w2_ref[...], preferred_element_type=jnp.float32) + b2_ref[...]

    # LogSoftmax over the last axis (PyTorch nn.LogSoftmax() on 2D -> dim=1).
    m = jnp.max(logits, axis=-1, keepdims=True)
    shifted = logits - m
    lse = jnp.log(jnp.sum(jnp.exp(shifted), axis=-1, keepdims=True))
    o_ref[...] = (shifted - lse).astype(o_ref.dtype)


def _weight_pipeline_kwargs():
    """Single-buffer constant-index (weight/bias) blocks when the API allows it."""
    try:
        mode = pl.Buffered(1)
        pl.BlockSpec((8, 128), lambda i: (0, 0), pipeline_mode=mode)
        return {"pipeline_mode": mode}
    except Exception:
        return {}


def ffnn_forward(x, w1_t, b1, w2_t, b2, *, max_block_m: int = 2048):
    """x: (B, D) f32. w1_t: (D, H), b1: (H,), w2_t: (H, O), b2: (O,)."""
    B, D = x.shape
    H = w1_t.shape[1]
    O = w2_t.shape[1]

    # ---- Lane-dense output: pad the class dim to a multiple of 128 lanes. ----
    Op = _round_up(max(O, 128), 128)
    if Op != O:
        w2_t = jnp.pad(w2_t, ((0, 0), (0, Op - O)))                       # zero weights
        b2 = jnp.pad(b2, (0, Op - O), constant_values=_NEG_BIG)           # -inf-ish bias

    # ---- Batch tiling: biggest tile that amortizes per-step overhead, but keep ----
    # ---- >= 2 grid steps (for v7x's 2 TCs) when each half still has >= 256 rows. ----
    Bp8 = _round_up(B, 8)
    tm = min(max_block_m, Bp8)
    if Bp8 >= 512:
        tm = min(tm, _round_up(pl.cdiv(Bp8, 2), 8))
    steps = pl.cdiv(Bp8, tm)
    Bp = steps * tm
    if Bp != B:
        # Padded rows are row-independent, produce log(1/Op)-style junk, and are
        # sliced off below; they never affect valid rows.
        x = jnp.pad(x, ((0, Bp - B), (0, 0)))

    b1_2d = b1.reshape(1, H)
    b2_2d = b2.reshape(1, Op)

    # ---- Explicit VMEM budget (respects v7x's 64 MiB physical VMEM). ----
    itemsize = 4
    x_bytes = 2 * tm * D * itemsize                      # input tile, double-buffered
    out_bytes = 2 * tm * Op * itemsize                   # output tile, double-buffered
    wgt_bytes = (D * H + H + H * Op + Op) * itemsize     # weights/biases, single buffer
    interm_bytes = (tm * H + 2 * tm * Op) * itemsize     # h / logits staging headroom
    vmem_limit = 2 * (x_bytes + out_bytes + wgt_bytes + interm_bytes) + (4 << 20)
    vmem_limit = int(min(max(vmem_limit, 32 << 20), 64 << 20))

    wkw = _weight_pipeline_kwargs()

    cost = pl.CostEstimate(
        flops=2 * Bp * D * H + 2 * Bp * H * Op,
        transcendentals=Bp * Op + Bp,  # exp per logit + log per row
        bytes_accessed=itemsize * (Bp * D + D * H + H + H * Op + Op + Bp * Op),
    )

    out = pl.pallas_call(
        ffnn_kernel,
        out_shape=jax.ShapeDtypeStruct((Bp, Op), jnp.float32),
        grid=(steps,),
        in_specs=[
            pl.BlockSpec((tm, D), lambda i: (i, 0)),            # x: tile over batch
            pl.BlockSpec((D, H), lambda i: (0, 0), **wkw),      # w1: VMEM-resident
            pl.BlockSpec((1, H), lambda i: (0, 0), **wkw),      # b1
            pl.BlockSpec((H, Op), lambda i: (0, 0), **wkw),     # w2 (lane-padded)
            pl.BlockSpec((1, Op), lambda i: (0, 0), **wkw),     # b2 (lane-padded)
        ],
        out_specs=pl.BlockSpec((tm, Op), lambda i: (i, 0)),
        compiler_params=pltpu.CompilerParams(
            # Batch axis is embarrassingly parallel -> both TCs on v7x; free elsewhere.
            dimension_semantics=("parallel",),
            vmem_limit_bytes=vmem_limit,
        ),
        cost_estimate=cost,
    )(x, w1_t, b1_2d, w2_t, b2_2d)

    return out[:B, :O]


def reference_forward(x, w1_t, b1, w2_t, b2):
    h = jnp.maximum(x @ w1_t + b1, 0.0)
    logits = h @ w2_t + b2
    return jax.nn.log_softmax(logits, axis=-1)


if __name__ == "__main__":
    key = jax.random.PRNGKey(0)
    input_dim, hidden, output_dim = 32, 32, 5

    k_x, k_w1, k_b1, k_w2, k_b2 = jax.random.split(key, 5)

    # Deterministic parameter init (Kaiming-uniform-style bounds, like nn.Linear).
    bound1 = 1.0 / (input_dim ** 0.5)
    w1_t = jax.random.uniform(k_w1, (input_dim, hidden), jnp.float32, -bound1, bound1)
    b1 = jax.random.uniform(k_b1, (hidden,), jnp.float32, -bound1, bound1)

    bound2 = 1.0 / (hidden ** 0.5)
    w2_t = jax.random.uniform(k_w2, (hidden, output_dim), jnp.float32, -bound2, bound2)
    b2 = jax.random.uniform(k_b2, (output_dim,), jnp.float32, -bound2, bound2)

    # Case 1: batch large enough to exercise the >=2-step pipelined grid.
    # Case 2: small, non-multiple-of-8 batch to exercise the pad-and-slice path.
    for batch in (512, 37):
        x = jax.random.normal(k_x, (batch, input_dim), dtype=jnp.float32)
        out = ffnn_forward(x, w1_t, b1, w2_t, b2)
        out = jax.block_until_ready(out)

        ref = reference_forward(x, w1_t, b1, w2_t, b2)
        assert out.shape == (batch, output_dim)
        assert jnp.allclose(out, ref, atol=1e-5, rtol=1e-5), f"mismatch vs reference (batch={batch})"

    print("KERNEL_OK")
</pallas_src>

<mosaic_0001>
module attributes {stable_mosaic.version = 11 : i64} {
  func.func @ffnn_kernel(%arg0: i32, %arg1: memref<256x32xf32, #tpu.memory_space<vmem>>, %arg2: memref<32x32xf32, #tpu.memory_space<vmem>>, %arg3: memref<1x32xf32, #tpu.memory_space<vmem>>, %arg4: memref<32x128xf32, #tpu.memory_space<vmem>>, %arg5: memref<1x128xf32, #tpu.memory_space<vmem>>, %arg6: memref<256x128xf32, #tpu.memory_space<vmem>>) attributes {dimension_semantics = [#tpu.dimension_semantics<parallel>], iteration_bounds = array<i64: 2>, scalar_prefetch = 0 : i64, scratch_operands = 0 : i64, tpu.core_type = #tpu.core_type<tc>, window_params = [{transform_indices = @transform_0, window_bounds = array<i64: 256, 32>}, {pipeline_mode = #tpu.pipeline_mode<synchronous>, transform_indices = @transform_1, window_bounds = array<i64: 32, 32>}, {pipeline_mode = #tpu.pipeline_mode<synchronous>, transform_indices = @transform_2, window_bounds = array<i64: 1, 32>}, {pipeline_mode = #tpu.pipeline_mode<synchronous>, transform_indices = @transform_3, window_bounds = array<i64: 32, 128>}, {pipeline_mode = #tpu.pipeline_mode<synchronous>, transform_indices = @transform_4, window_bounds = array<i64: 1, 128>}, {transform_indices = @transform_5, window_bounds = array<i64: 256, 128>}]} {
    %c0 = arith.constant 0 : index
    %c0_0 = arith.constant 0 : index
    %0 = vector.load %arg1[%c0, %c0_0] : memref<256x32xf32, #tpu.memory_space<vmem>>, vector<256x32xf32>
    %c0_1 = arith.constant 0 : index
    %c0_2 = arith.constant 0 : index
    %1 = vector.load %arg2[%c0_1, %c0_2] : memref<32x32xf32, #tpu.memory_space<vmem>>, vector<32x32xf32>
    %cst = arith.constant dense<0.000000e+00> : vector<256x32xf32>
    %2 = tpu.matmul %0, %1, %cst {dimension_numbers = #tpu.dot_dimension_numbers<[1], [0], [0], [1], [0, 0, 1, 1], [], []>} : vector<256x32xf32>, vector<32x32xf32>, vector<256x32xf32> -> vector<256x32xf32>
    %c0_3 = arith.constant 0 : index
    %c0_4 = arith.constant 0 : index
    %3 = vector.load %arg3[%c0_3, %c0_4] : memref<1x32xf32, #tpu.memory_space<vmem>>, vector<1x32xf32>
    %4 = vector.broadcast %3 : vector<1x32xf32> to vector<256x32xf32>
    %5 = arith.addf %2, %4 : vector<256x32xf32>
    %cst_5 = arith.constant 0.000000e+00 : f32
    %6 = vector.broadcast %cst_5 : f32 to vector<256x32xf32>
    %7 = arith.maximumf %5, %6 : vector<256x32xf32>
    %c0_6 = arith.constant 0 : index
    %c0_7 = arith.constant 0 : index
    %8 = vector.load %arg4[%c0_6, %c0_7] : memref<32x128xf32, #tpu.memory_space<vmem>>, vector<32x128xf32>
    %cst_8 = arith.constant dense<0.000000e+00> : vector<256x128xf32>
    %9 = tpu.matmul %7, %8, %cst_8 {dimension_numbers = #tpu.dot_dimension_numbers<[1], [0], [0], [1], [0, 0, 1, 1], [], []>} : vector<256x32xf32>, vector<32x128xf32>, vector<256x128xf32> -> vector<256x128xf32>
    %c0_9 = arith.constant 0 : index
    %c0_10 = arith.constant 0 : index
    %10 = vector.load %arg5[%c0_9, %c0_10] : memref<1x128xf32, #tpu.memory_space<vmem>>, vector<1x128xf32>
    %11 = vector.broadcast %10 : vector<1x128xf32> to vector<256x128xf32>
    %12 = arith.addf %9, %11 : vector<256x128xf32>
    %cst_11 = arith.constant dense<0xFF800000> : vector<256xf32>
    %13 = vector.multi_reduction <maximumf>, %12, %cst_11 [1] : vector<256x128xf32> to vector<256xf32>
    %14 = vector.shape_cast %13 : vector<256xf32> to vector<256x1xf32>
    %15 = vector.broadcast %14 : vector<256x1xf32> to vector<256x128xf32>
    %16 = arith.subf %12, %15 : vector<256x128xf32>
    %17 = math.exp %16 : vector<256x128xf32>
    %cst_12 = arith.constant dense<0.000000e+00> : vector<256xf32>
    %18 = vector.multi_reduction <add>, %17, %cst_12 [1] : vector<256x128xf32> to vector<256xf32>
    %19 = vector.shape_cast %18 : vector<256xf32> to vector<256x1xf32>
    %20 = math.log %19 : vector<256x1xf32>
    %21 = vector.broadcast %20 : vector<256x1xf32> to vector<256x128xf32>
    %22 = arith.subf %16, %21 : vector<256x128xf32>
    %c0_13 = arith.constant 0 : index
    %c0_14 = arith.constant 0 : index
    %23 = vector.load %arg6[%c0_13, %c0_14] : memref<256x128xf32, #tpu.memory_space<vmem>>, vector<256x128xf32>
    tpu.vector_store %arg6[%c0_13, %c0_14], %22 {strides = array<i32>} : memref<256x128xf32, #tpu.memory_space<vmem>>, vector<256x128xf32>,
    return
  }
  func.func @transform_0(%arg0: i32) -> (i32, i32) {
    %c0_i32 = arith.constant 0 : i32
    %c0_i32_0 = arith.constant 0 : i32
    return %arg0, %c0_i32 : i32, i32
  }
  func.func @transform_1(%arg0: i32) -> (i32, i32) {
    %c0_i32 = arith.constant 0 : i32
    %c0_i32_0 = arith.constant 0 : i32
    %c0_i32_1 = arith.constant 0 : i32
    return %c0_i32, %c0_i32_0 : i32, i32
  }
  func.func @transform_2(%arg0: i32) -> (i32, i32) {
    %c0_i32 = arith.constant 0 : i32
    %c0_i32_0 = arith.constant 0 : i32
    %c0_i32_1 = arith.constant 0 : i32
    return %c0_i32, %c0_i32_0 : i32, i32
  }
  func.func @transform_3(%arg0: i32) -> (i32, i32) {
    %c0_i32 = arith.constant 0 : i32
    %c0_i32_0 = arith.constant 0 : i32
    %c0_i32_1 = arith.constant 0 : i32
    return %c0_i32, %c0_i32_0 : i32, i32
  }
  func.func @transform_4(%arg0: i32) -> (i32, i32) {
    %c0_i32 = arith.constant 0 : i32
    %c0_i32_0 = arith.constant 0 : i32
    %c0_i32_1 = arith.constant 0 : i32
    return %c0_i32, %c0_i32_0 : i32, i32
  }
  func.func @transform_5(%arg0: i32) -> (i32, i32) {
    %c0_i32 = arith.constant 0 : i32
    %c0_i32_0 = arith.constant 0 : i32
    return %arg0, %c0_i32 : i32, i32
  }
}

</mosaic_0001>

<llo_original>
// kernel: tpu_custom_call.1
$region0: #{tpu_custom_call.1}
  #allocation0 [shape = 'u32[]', space=smem, size = 0x4, offset = 0x4, fixed_abs, tag = 'smem constant byte address 0x4 - core index']
  #allocation1 [shape = 'u32[144,128]{1,0:T(1,128)}', space=vmem, size = 0x12000, scoped, tag = 'internal scratch']
  %s0 = inlined_call_operand.vmem [shape: f32[512,32], index: 0, kind: input, shape index: {}]
  %s1 = inlined_call_operand.vmem [shape: f32[32,32], index: 1, kind: input, shape index: {}]
  %s2 = inlined_call_operand.vmem [shape: f32[1,32], index: 2, kind: input, shape index: {}]
  %s3 = inlined_call_operand.vmem [shape: f32[32,128], index: 3, kind: input, shape index: {}]
  %s4 = inlined_call_operand.vmem [shape: f32[1,128], index: 4, kind: input, shape index: {}]
  %s5 = inlined_call_operand.hbm [shape: f32[512,128], index: 5, kind: output, shape index: {}]
  %s6 = sld [smem:[#allocation0]]
  $region53: #{tpu_custom_call.1} parent=0
    _
  %s8 = ssub.s32 1, %s6
  %s9 = scalar_select 0, %s8, %s6
  $region1: #{tpu_custom_call.1} parent=0
    #allocation2 [shape = 'u8[262144]{0}', space=vmem, size = 0x40000, scoped, tag = 'output window, operand 0']
    #allocation3 [shape = 's32[2]{0}', space=sflag, size = 0x8, scoped, tag = 'scoped memory for tpu_custom_call.1']
    %10 = vsyncpa [#allocation3], 0
    %s11 = scalar_lea.sflag [#allocation3], 1
    %12 = vsyncpa %s11, 0
    loop: start=0, step=1, limit=4
    $region2: #{tpu_custom_call.1} parent=1 // loop_pre_header
      _
    $region3: #{tpu_custom_call.1} parent=1 // loop_header
      %s14 = sphi 0, %s18
      %p15 = scmp.ge.s32.totalorder %s14, 4
      %s24 = sphi 0, %s26
      %s27 = sphi 0, %s24
      %s28 = sphi 0, %s27
      %s44 = sphi 0, %s28
      %s48 = sphi 0, %s48
      %s50 = sphi 0, %s48
      %s51 = sphi 0, %s50
      %s65 = sphi 0, %s51
      %s69 = sphi 0, %s69
      %s71 = sphi 0, %s69
      %s72 = sphi 0, %s71
      %s86 = sphi 0, %s72
      %s90 = sphi 0, %s90
      %s92 = sphi 0, %s90
      %s93 = sphi 0, %s92
      %s107 = sphi 0, %s93
      %s111 = sphi 0, %s111
      %s113 = sphi 0, %s111
      %s114 = sphi 0, %s113
      %s128 = sphi 0, %s114
      %s134 = sphi 0, %s136
      %s137 = sphi 0, %s134
      %s138 = sphi 0, %s137
      %s154 = sphi 0, %s138
    $region4: #{tpu_custom_call.1} parent=1 // loop_header_branch
      %17 = sbr.rel (%p15) target = $region8
    $region5: #{tpu_custom_call.1} parent=1 // loop_body
      %s19 = ssub.s32 %s14, 1
      %s20 = ssub.s32 %s14, 2
      %s21 = sadd.s32 %s14, 1
      %s22 = ssub.s32 %s14, %s21
      %p23 = scmp.eq.s32.totalorder %s22, 0
      %s25 = sadd.s32 %s24, 1
      %s26 = scalar_select %p23, %s24, %s25
      %p29 = pneg %p23
      %p30 = scmp.eq.s32.totalorder %s14, 1
      %p31 = por %p29, %p30
      %p32 = scmp.ne.s32.totalorder %s24, %s27
      %p33 = scmp.eq.s32.totalorder %s14, 0
      %p34 = por %p32, %p33
      %p35 = scmp.ne.s32.totalorder %s24, %s27
      %p36 = scmp.eq.s32.totalorder %s19, 1
      %p37 = por %p35, %p36
      %p38 = scmp.ne.s32.totalorder %s27, %s28
      %p39 = scmp.eq.s32.totalorder %s19, 0
      %p40 = por %p38, %p39
      %p41 = scmp.ne.s32.totalorder %s27, %s28
      %p42 = scmp.eq.s32.totalorder %s20, 1
      %p43 = por %p41, %p42
      %p45 = scmp.ne.s32.totalorder %s28, %s44
      %p46 = scmp.eq.s32.totalorder %s20, 0
      %p47 = por %p45, %p46
      %s49 = sadd.s32 %s48, 1
      %p52 = scmp.eq.s32.totalorder %s14, 1
      %p53 = scmp.ne.s32.totalorder %s48, %s50
      %p54 = scmp.eq.s32.totalorder %s14, 0
      %p55 = por %p53, %p54
      %p56 = scmp.ne.s32.totalorder %s48, %s50
      %p57 = scmp.eq.s32.totalorder %s19, 1
      %p58 = por %p56, %p57
      %p59 = scmp.ne.s32.totalorder %s50, %s51
      %p60 = scmp.eq.s32.totalorder %s19, 0
      %p61 = por %p59, %p60
      %p62 = scmp.ne.s32.totalorder %s50, %s51
      %p63 = scmp.eq.s32.totalorder %s20, 1
      %p64 = por %p62, %p63
      %p66 = scmp.ne.s32.totalorder %s51, %s65
      %p67 = scmp.eq.s32.totalorder %s20, 0
      %p68 = por %p66, %p67
      %s70 = sadd.s32 %s69, 1
      %p73 = scmp.eq.s32.totalorder %s14, 1
      %p74 = scmp.ne.s32.totalorder %s69, %s71
      %p75 = scmp.eq.s32.totalorder %s14, 0
      %p76 = por %p74, %p75
      %p77 = scmp.ne.s32.totalorder %s69, %s71
      %p78 = scmp.eq.s32.totalorder %s19, 1
      %p79 = por %p77, %p78
      %p80 = scmp.ne.s32.totalorder %s71, %s72
      %p81 = scmp.eq.s32.totalorder %s19, 0
      %p82 = por %p80, %p81
      %p83 = scmp.ne.s32.totalorder %s71, %s72
      %p84 = scmp.eq.s32.totalorder %s20, 1
      %p85 = por %p83, %p84
      %p87 = scmp.ne.s32.totalorder %s72, %s86
      %p88 = scmp.eq.s32.totalorder %s20, 0
      %p89 = por %p87, %p88
      %s91 = sadd.s32 %s90, 1
      %p94 = scmp.eq.s32.totalorder %s14, 1
      %p95 = scmp.ne.s32.totalorder %s90, %s92
      %p96 = scmp.eq.s32.totalorder %s14, 0
      %p97 = por %p95, %p96
      %p98 = scmp.ne.s32.totalorder %s90, %s92
      %p99 = scmp.eq.s32.totalorder %s19, 1
      %p100 = por %p98, %p99
      %p101 = scmp.ne.s32.totalorder %s92, %s93
      %p102 = scmp.eq.s32.totalorder %s19, 0
      %p103 = por %p101, %p102
      %p104 = scmp.ne.s32.totalorder %s92, %s93
      %p105 = scmp.eq.s32.totalorder %s20, 1
      %p106 = por %p104, %p105
      %p108 = scmp.ne.s32.totalorder %s93, %s107
      %p109 = scmp.eq.s32.totalorder %s20, 0
      %p110 = por %p108, %p109
      %s112 = sadd.s32 %s111, 1
      %p115 = scmp.eq.s32.totalorder %s14, 1
      %p116 = scmp.ne.s32.totalorder %s111, %s113
      %p117 = scmp.eq.s32.totalorder %s14, 0
      %p118 = por %p116, %p117
      %p119 = scmp.ne.s32.totalorder %s111, %s113
      %p120 = scmp.eq.s32.totalorder %s19, 1
      %p121 = por %p119, %p120
      %p122 = scmp.ne.s32.totalorder %s113, %s114
      %p123 = scmp.eq.s32.totalorder %s19, 0
      %p124 = por %p122, %p123
      %p125 = scmp.ne.s32.totalorder %s113, %s114
      %p126 = scmp.eq.s32.totalorder %s20, 1
      %p127 = por %p125, %p126
      %p129 = scmp.ne.s32.totalorder %s114, %s128
      %p130 = scmp.eq.s32.totalorder %s20, 0
      %p131 = por %p129, %p130
      %s132 = ssub.s32 %s14, %s21
      %p133 = scmp.eq.s32.totalorder %s132, 0
      %s135 = sadd.s32 %s134, 1
      %s136 = scalar_select %p133, %s134, %s135
      %p139 = pneg %p133
      %p140 = scmp.eq.s32.totalorder %s14, 1
      %p141 = por %p139, %p140
      %p142 = scmp.ne.s32.totalorder %s134, %s137
      %p143 = scmp.eq.s32.totalorder %s14, 0
      %p144 = por %p142, %p143
      %p145 = scmp.ne.s32.totalorder %s134, %s137
      %p146 = scmp.eq.s32.totalorder %s19, 1
      %p147 = por %p145, %p146
      %p148 = scmp.ne.s32.totalorder %s137, %s138
      %p149 = scmp.eq.s32.totalorder %s19, 0
      %p150 = por %p148, %p149
      %p151 = scmp.ne.s32.totalorder %s137, %s138
      %p152 = scmp.eq.s32.totalorder %s20, 1
      %p153 = por %p151, %p152
      %p155 = scmp.ne.s32.totalorder %s138, %s154
      %p156 = scmp.eq.s32.totalorder %s20, 0
      %p157 = por %p155, %p156
      %p158 = scmp.le.s32.totalorder 1, %s14
      %p159 = scmp.lt.s32.totalorder %s14, 3
      %p160 = pnand %p158, %p159
      %p161 = pneg %p160
      // Predicated region
      $region9: #{tpu_custom_call.1} parent=5 // pred_check
        _
      $region10: #{tpu_custom_call.1} parent=5 // pred_check_branch
        %163 = sbr.rel (%p160) target = $region12
      $region11: #{tpu_custom_call.1} parent=5 // pred_region
        %s164 = ssub.s32 %s14, 1
        // Predicated region
        $region13: #{tpu_custom_call.1} parent=11 // pred_check
          %p165 = pneg %p61
        $region14: #{tpu_custom_call.1} parent=11 // pred_check_branch
          %167 = sbr.rel (%p165) target = $region16
        $region15: #{tpu_custom_call.1} parent=11 // pred_region
          _
        $region16: #{tpu_custom_call.1} parent=11 // pred_fallthru
          _
        // Predicated region
        $region17: #{tpu_custom_call.1} parent=11 // pred_check
          %p168 = pneg %p82
        $region18: #{tpu_custom_call.1} parent=11 // pred_check_branch
          %170 = sbr.rel (%p168) target = $region20
        $region19: #{tpu_custom_call.1} parent=11 // pred_region
          _
        $region20: #{tpu_custom_call.1} parent=11 // pred_fallthru
          _
        // Predicated region
        $region21: #{tpu_custom_call.1} parent=11 // pred_check
          %p171 = pneg %p103
        $region22: #{tpu_custom_call.1} parent=11 // pred_check_branch
          %173 = sbr.rel (%p171) target = $region24
        $region23: #{tpu_custom_call.1} parent=11 // pred_region
          _
        $region24: #{tpu_custom_call.1} parent=11 // pred_fallthru
          _
        // Predicated region
        $region25: #{tpu_custom_call.1} parent=11 // pred_check
          %p174 = pneg %p124
        $region26: #{tpu_custom_call.1} parent=11 // pred_check_branch
          %176 = sbr.rel (%p174) target = $region28
        $region27: #{tpu_custom_call.1} parent=11 // pred_region
          _
        $region28: #{tpu_custom_call.1} parent=11 // pred_fallthru
          _
      $region12: #{tpu_custom_call.1} parent=5 // pred_fallthru
        _
      %p177 = scmp.lt.s32.totalorder %s14, 2
      // Predicated region
      $region29: #{tpu_custom_call.1} parent=5 // pred_check
        %p178 = pneg %p177
      $region30: #{tpu_custom_call.1} parent=5 // pred_check_branch
        %180 = sbr.rel (%p178) target = $region32
      $region31: #{tpu_custom_call.1} parent=5 // pred_region
        // Predicated region
        $region33: #{tpu_custom_call.1} parent=31 // pred_check
          %p181 = pneg %p34
        $region34: #{tpu_custom_call.1} parent=31 // pred_check_branch
          %183 = sbr.rel (%p181) target = $region36
        $region35: #{tpu_custom_call.1} parent=31 // pred_region
          %s184 = smul.u32 32, %s14
          %p185 = scmp.lt.s32.totalorder %s184, 63
          %s186 = scalar_select %p185, %s184, 63
          %s187 = smul.addr %s186, 8
          %s188 = scalar_lea.vmem %s0, %s187
          %s189 = smul.u32 32, %s14
        $region36: #{tpu_custom_call.1} parent=31 // pred_fallthru
          _
      $region32: #{tpu_custom_call.1} parent=5 // pred_fallthru
        _
      %p190 = scmp.le.s32.totalorder 1, %s14
      %p191 = scmp.lt.s32.totalorder %s14, 3
      %p192 = pnand %p190, %p191
      %p193 = pneg %p192
      // Predicated region
      $region37: #{tpu_custom_call.1} parent=5 // pred_check
        _
      $region38: #{tpu_custom_call.1} parent=5 // pred_check_branch
        %195 = sbr.rel (%p192) target = $region40
      $region39: #{tpu_custom_call.1} parent=5 // pred_region
        %s196 = ssub.s32 %s14, 1
        %s197 = smul.u32 32, %s19
        %p198 = scmp.lt.s32.totalorder %s197, 63
        %s199 = scalar_select %p198, %s197, 63
        %s200 = smul.addr %s199, 8
        %s201 = scalar_lea.vmem %s0, %s200
        %p202 = pneg %p40
        %p203 = pneg %p37
        %p204 = pneg %p61
        %p205 = pneg %p58
        %p206 = pneg %p82
        %p207 = pneg %p79
        %p208 = pneg %p103
        %p209 = pneg %p100
        %p210 = pneg %p124
        %p211 = pneg %p121
        %p212 = pneg %p150
        %p213 = pneg %p147
        %s214 = sand.u32 %s137, 1
        %s215 = scalar_lea.sflag [#allocation3], %s214
        %s216 = sand.u32 %s137, 1
        %s217 = smul.addr %s216, 256
        %s218 = scalar_lea.vmem [#allocation2], %s217
        %s219 = smul.u32 32, %s19
        %p220 = scmp.lt.s32.totalorder %s219, 63
        %s221 = scalar_select %p220, %s219, 63
        %s222 = smul.addr %s221, 8
        %s223 = scalar_lea.vmem %s0, %s222
        %s224 = smul.u32 32, %s19
        %s225 = smul.u32 32, %s19
        %v226 = vld [vmem:[%s223] sm:$0xff]
        %v227 = vld [vmem:[%s223 + $0x8] sm:$0xff]
        %v228 = vld [vmem:[%s223 + $0x10] sm:$0xff]
        %v229 = vld [vmem:[%s223 + $0x18] sm:$0xff]
        %v230 = vld [vmem:[%s223 + $0x20] sm:$0xff]
        %v231 = vld [vmem:[%s223 + $0x28] sm:$0xff]
        %v232 = vld [vmem:[%s223 + $0x30] sm:$0xff]
        %v233 = vld [vmem:[%s223 + $0x38] sm:$0xff]
        %v234 = vld [vmem:[%s223 + $0x40] sm:$0xff]
        %v235 = vld [vmem:[%s223 + $0x48] sm:$0xff]
        %v236 = vld [vmem:[%s223 + $0x50] sm:$0xff]
        %v237 = vld [vmem:[%s223 + $0x58] sm:$0xff]
        %v238 = vld [vmem:[%s223 + $0x60] sm:$0xff]
        %v239 = vld [vmem:[%s223 + $0x68] sm:$0xff]
        %v240 = vld [vmem:[%s223 + $0x70] sm:$0xff]
        %v241 = vld [vmem:[%s223 + $0x78] sm:$0xff]
        %v242 = vld [vmem:[%s223 + $0x80] sm:$0xff]
        %v243 = vld [vmem:[%s223 + $0x88] sm:$0xff]
        %v244 = vld [vmem:[%s223 + $0x90] sm:$0xff]
        %v245 = vld [vmem:[%s223 + $0x98] sm:$0xff]
        %v246 = vld [vmem:[%s223 + $0xa0] sm:$0xff]
        %v247 = vld [vmem:[%s223 + $0xa8] sm:$0xff]
        %v248 = vld [vmem:[%s223 + $0xb0] sm:$0xff]
        %v249 = vld [vmem:[%s223 + $0xb8] sm:$0xff]
        %v250 = vld [vmem:[%s223 + $0xc0] sm:$0xff]
        %v251 = vld [vmem:[%s223 + $0xc8] sm:$0xff]
        %v252 = vld [vmem:[%s223 + $0xd0] sm:$0xff]
        %v253 = vld [vmem:[%s223 + $0xd8] sm:$0xff]
        %v254 = vld [vmem:[%s223 + $0xe0] sm:$0xff]
        %v255 = vld [vmem:[%s223 + $0xe8] sm:$0xff]
        %v256 = vld [vmem:[%s223 + $0xf0] sm:$0xff]
        %v257 = vld [vmem:[%s223 + $0xf8] sm:$0xff]
        %v258 = vld [vmem:[%s1] sm:$0xff]
        %v259 = vld [vmem:[%s1 + $0x8] sm:$0xff]
        %v260 = vld [vmem:[%s1 + $0x10] sm:$0xff]
        %v261 = vld [vmem:[%s1 + $0x18] sm:$0xff]
        %v262 = vld [vmem:[%s2] sm:$0x1]
        %v264 = vlaneseq
        %v265 = vshrl.u32 %v264, 7
        %v266 = vsub.s32 0, %v265
        %v267 = vrot.slane %v262, %v266
        %vm269 = vcmask 261120
        %v271 = vsel %vm269, %v226, 0
        %v274 = vsel %vm269, %v227, 0
        %v277 = vsel %vm269, %v228, 0
        %v280 = vsel %vm269, %v229, 0
        %v283 = vsel %vm269, %v230, 0
        %v286 = vsel %vm269, %v231, 0
        %v289 = vsel %vm269, %v232, 0
        %v292 = vsel %vm269, %v233, 0
        %v295 = vsel %vm269, %v234, 0
        %v298 = vsel %vm269, %v235, 0
        %v301 = vsel %vm269, %v236, 0
        %v304 = vsel %vm269, %v237, 0
        %v307 = vsel %vm269, %v238, 0
        %v310 = vsel %vm269, %v239, 0
        %v313 = vsel %vm269, %v240, 0
        %v316 = vsel %vm269, %v241, 0
        %v319 = vsel %vm269, %v242, 0
        %v322 = vsel %vm269, %v243, 0
        %v325 = vsel %vm269, %v244, 0
        %v328 = vsel %vm269, %v245, 0
        %v331 = vsel %vm269, %v246, 0
        %v334 = vsel %vm269, %v247, 0
        %v337 = vsel %vm269, %v248, 0
        %v340 = vsel %vm269, %v249, 0
        %v343 = vsel %vm269, %v250, 0
        %v346 = vsel %vm269, %v251, 0
        %v349 = vsel %vm269, %v252, 0
        %v352 = vsel %vm269, %v253, 0
        %v355 = vsel %vm269, %v254, 0
        %v358 = vsel %vm269, %v255, 0
        %v361 = vsel %vm269, %v256, 0
        %v364 = vsel %vm269, %v257, 0
        %366 = vmatprep.subr.mxu0 0.0
        %367 = vmatpush1.msra.mxu0 %v258
        %368 = vmatprep.subr.mxu0 0.0
        %369 = vmatpush1.msra.mxu0 %v259
        %370 = vmatprep.subr.mxu0 0.0
        %371 = vmatpush1.msra.mxu0 %v260
        %372 = vmatprep.subr.mxu0 0.0
        %373 = vmatpush1.msra.mxu0 %v261
        %374 = vmatprep.subr.mxu0 0.0
        %375 = vmatpush1.msra.mxu0 0.0
        %376 = vmatprep.subr.mxu0 0.0
        %377 = vmatpush1.msra.mxu0 0.0
        %378 = vmatprep.subr.mxu0 0.0
        %379 = vmatpush1.msra.mxu0 0.0
        %380 = vmatprep.subr.mxu0 0.0
        %381 = vmatpush1.msra.mxu0 0.0
        %382 = vmatprep.subr.mxu0 0.0
        %383 = vmatpush1.msra.mxu0 0.0
        %384 = vmatprep.subr.mxu0 0.0
        %385 = vmatpush1.msra.mxu0 0.0
        %386 = vmatprep.subr.mxu0 0.0
        %387 = vmatpush1.msra.mxu0 0.0
        %388 = vmatprep.subr.mxu0 0.0
        %389 = vmatpush1.msra.mxu0 0.0
        %390 = vmatprep.subr.mxu0 0.0
        %391 = vmatpush1.msra.mxu0 0.0
        %392 = vmatprep.subr.mxu0 0.0
        %393 = vmatpush1.msra.mxu0 0.0
        %394 = vmatprep.subr.mxu0 0.0
        %395 = vmatpush1.msra.mxu0 0.0
        %396 = vmatprep.subr.mxu0 0.0
        %397 = vmatpush1.msra.mxu0 0.0
        %398 = vmatprep.subr.mxu0 0.0
        %399 = vmatpush1.msra.mxu0 0.0
        %400 = vmatprep.subr.mxu0 0.0
        %401 = vmatpush1.msra.mxu0 0.0
        %402 = vmatprep.subr.mxu0 0.0
        %403 = vmatpush1.msra.mxu0 0.0
        %404 = vmatprep.subr.mxu0 0.0
        %405 = vmatpush1.msra.mxu0 0.0
        %406 = vmatprep.subr.mxu0 0.0
        %407 = vmatpush1.msra.mxu0 0.0
        %408 = vmatprep.subr.mxu0 0.0
        %409 = vmatpush1.msra.mxu0 0.0
        %410 = vmatprep.subr.mxu0 0.0
        %411 = vmatpush1.msra.mxu0 0.0
        %412 = vmatprep.subr.mxu0 0.0
        %413 = vmatpush1.msra.mxu0 0.0
        %414 = vmatprep.subr.mxu0 0.0
        %415 = vmatpush1.msra.mxu0 0.0
        %416 = vmatprep.subr.mxu0 0.0
        %417 = vmatpush1.msra.mxu0 0.0
        %418 = vmatprep.subr.mxu0 0.0
        %419 = vmatpush1.msra.mxu0 0.0
        %420 = vmatprep.subr.mxu0 0.0
        %421 = vmatpush1.msra.mxu0 0.0
        %422 = vmatprep.subr.mxu0 0.0
        %423 = vmatpush1.msra.mxu0 0.0
        %424 = vmatprep.subr.mxu0 0.0
        %425 = vmatpush1.msra.mxu0 0.0
        %426 = vmatprep.subr.mxu0 0.0
        %427 = vmatpush1.msra.mxu0 0.0
        %428 = vmatprep.subr.mxu0 0.0
        %429 = vmatpush1.msra.mxu0 0.0
        %430 = vmatprep.mubr.f32.mxu0 0.0
        %431 = vmatmul.mubr.f32.gmra.mrb[0].mxu0 %v271
        %v432 = vpop.f32.mrb[0].mxu0
        %v433 = vadd.f32 %v267, %v432
        %v434 = vpop.f32.mrb[0].mxu0
        %435 = vmatprep.mubr.f32.mxu0 0.0
        %436 = vmatmul.mubr.f32.gmra.mrb[0].mxu0 %v274
        %v437 = vpop.f32.mrb[0].mxu0
        %v438 = vadd.f32 %v267, %v437
        %v439 = vpop.f32.mrb[0].mxu0
        %440 = vmatprep.mubr.f32.mxu0 0.0
        %441 = vmatmul.mubr.f32.gmra.mrb[0].mxu0 %v277
        %v442 = vpop.f32.mrb[0].mxu0
        %v443 = vadd.f32 %v267, %v442
        %v444 = vpop.f32.mrb[0].mxu0
        %445 = vmatprep.mubr.f32.mxu0 0.0
        %446 = vmatmul.mubr.f32.gmra.mrb[0].mxu0 %v280
        %v447 = vpop.f32.mrb[0].mxu0
        %v448 = vadd.f32 %v267, %v447
        %v449 = vpop.f32.mrb[0].mxu0
        %450 = vmatprep.mubr.f32.mxu0 0.0
        %451 = vmatmul.mubr.f32.gmra.mrb[0].mxu0 %v283
        %v452 = vpop.f32.mrb[0].mxu0
        %v453 = vadd.f32 %v267, %v452
        %v454 = vpop.f32.mrb[0].mxu0
        %455 = vmatprep.mubr.f32.mxu0 0.0
        %456 = vmatmul.mubr.f32.gmra.mrb[0].mxu0 %v286
        %v457 = vpop.f32.mrb[0].mxu0
        %v458 = vadd.f32 %v267, %v457
        %v459 = vpop.f32.mrb[0].mxu0
        %460 = vmatprep.mubr.f32.mxu0 0.0
        %461 = vmatmul.mubr.f32.gmra.mrb[0].mxu0 %v289
        %v462 = vpop.f32.mrb[0].mxu0
        %v463 = vadd.f32 %v267, %v462
        %v464 = vpop.f32.mrb[0].mxu0
        %465 = vmatprep.mubr.f32.mxu0 0.0
        %466 = vmatmul.mubr.f32.gmra.mrb[0].mxu0 %v292
        %v467 = vpop.f32.mrb[0].mxu0
        %v468 = vadd.f32 %v267, %v467
        %v469 = vpop.f32.mrb[0].mxu0
        %470 = vmatprep.mubr.f32.mxu0 0.0
        %471 = vmatmul.mubr.f32.gmra.mrb[0].mxu0 %v295
        %v472 = vpop.f32.mrb[0].mxu0
        %v473 = vadd.f32 %v267, %v472
        %v474 = vpop.f32.mrb[0].mxu0
        %475 = vmatprep.mubr.f32.mxu0 0.0
        %476 = vmatmul.mubr.f32.gmra.mrb[0].mxu0 %v298
        %v477 = vpop.f32.mrb[0].mxu0
        %v478 = vadd.f32 %v267, %v477
        %v479 = vpop.f32.mrb[0].mxu0
        %480 = vmatprep.mubr.f32.mxu0 0.0
        %481 = vmatmul.mubr.f32.gmra.mrb[0].mxu0 %v301
        %v482 = vpop.f32.mrb[0].mxu0
        %v483 = vadd.f32 %v267, %v482
        %v484 = vpop.f32.mrb[0].mxu0
        %485 = vmatprep.mubr.f32.mxu0 0.0
        %486 = vmatmul.mubr.f32.gmra.mrb[0].mxu0 %v304
        %v487 = vpop.f32.mrb[0].mxu0
        %v488 = vadd.f32 %v267, %v487
        %v489 = vpop.f32.mrb[0].mxu0
        %490 = vmatprep.mubr.f32.mxu0 0.0
        %491 = vmatmul.mubr.f32.gmra.mrb[0].mxu0 %v307
        %v492 = vpop.f32.mrb[0].mxu0
        %v493 = vadd.f32 %v267, %v492
        %v494 = vpop.f32.mrb[0].mxu0
        %495 = vmatprep.mubr.f32.mxu0 0.0
        %496 = vmatmul.mubr.f32.gmra.mrb[0].mxu0 %v310
        %v497 = vpop.f32.mrb[0].mxu0
        %v498 = vadd.f32 %v267, %v497
        %v499 = vpop.f32.mrb[0].mxu0
        %500 = vmatprep.mubr.f32.mxu0 0.0
        %501 = vmatmul.mubr.f32.gmra.mrb[0].mxu0 %v313
        %v502 = vpop.f32.mrb[0].mxu0
        %v503 = vadd.f32 %v267, %v502
        %v504 = vpop.f32.mrb[0].mxu0
        %505 = vmatprep.mubr.f32.mxu0 0.0
        %506 = vmatmul.mubr.f32.gmra.mrb[0].mxu0 %v316
        %v507 = vpop.f32.mrb[0].mxu0
        %v508 = vadd.f32 %v267, %v507
        %v509 = vpop.f32.mrb[0].mxu0
        %510 = vmatprep.mubr.f32.mxu0 0.0
        %511 = vmatmul.mubr.f32.gmra.mrb[0].mxu0 %v319
        %v512 = vpop.f32.mrb[0].mxu0
        %v513 = vadd.f32 %v267, %v512
        %v514 = vpop.f32.mrb[0].mxu0
        %515 = vmatprep.mubr.f32.mxu0 0.0
        %516 = vmatmul.mubr.f32.gmra.mrb[0].mxu0 %v322
        %v517 = vpop.f32.mrb[0].mxu0
        %v518 = vadd.f32 %v267, %v517
        %v519 = vpop.f32.mrb[0].mxu0
        %520 = vmatprep.mubr.f32.mxu0 0.0
        %521 = vmatmul.mubr.f32.gmra.mrb[0].mxu0 %v325
        %v522 = vpop.f32.mrb[0].mxu0
        %v523 = vadd.f32 %v267, %v522
        %v524 = vpop.f32.mrb[0].mxu0
        %525 = vmatprep.mubr.f32.mxu0 0.0
        %526 = vmatmul.mubr.f32.gmra.mrb[0].mxu0 %v328
        %v527 = vpop.f32.mrb[0].mxu0
        %v528 = vadd.f32 %v267, %v527
        %v529 = vpop.f32.mrb[0].mxu0
        %530 = vmatprep.mubr.f32.mxu0 0.0
        %531 = vmatmul.mubr.f32.gmra.mrb[0].mxu0 %v331
        %v532 = vpop.f32.mrb[0].mxu0
        %v533 = vadd.f32 %v267, %v532
        %v534 = vpop.f32.mrb[0].mxu0
        %535 = vmatprep.mubr.f32.mxu0 0.0
        %536 = vmatmul.mubr.f32.gmra.mrb[0].mxu0 %v334
        %v537 = vpop.f32.mrb[0].mxu0
        %v538 = vadd.f32 %v267, %v537
        %v539 = vpop.f32.mrb[0].mxu0
        %540 = vmatprep.mubr.f32.mxu0 0.0
        %541 = vmatmul.mubr.f32.gmra.mrb[0].mxu0 %v337
        %v542 = vpop.f32.mrb[0].mxu0
        %v543 = vadd.f32 %v267, %v542
        %v544 = vpop.f32.mrb[0].mxu0
        %545 = vmatprep.mubr.f32.mxu0 0.0
        %546 = vmatmul.mubr.f32.gmra.mrb[0].mxu0 %v340
        %v547 = vpop.f32.mrb[0].mxu0
        %v548 = vadd.f32 %v267, %v547
        %v549 = vpop.f32.mrb[0].mxu0
        %550 = vmatprep.mubr.f32.mxu0 0.0
        %551 = vmatmul.mubr.f32.gmra.mrb[0].mxu0 %v343
        %v552 = vpop.f32.mrb[0].mxu0
        %v553 = vadd.f32 %v267, %v552
        %v554 = vpop.f32.mrb[0].mxu0
        %555 = vmatprep.mubr.f32.mxu0 0.0
        %556 = vmatmul.mubr.f32.gmra.mrb[0].mxu0 %v346
        %v557 = vpop.f32.mrb[0].mxu0
        %v558 = vadd.f32 %v267, %v557
        %v559 = vpop.f32.mrb[0].mxu0
        %560 = vmatprep.mubr.f32.mxu0 0.0
        %561 = vmatmul.mubr.f32.gmra.mrb[0].mxu0 %v349
        %v562 = vpop.f32.mrb[0].mxu0
        %v563 = vadd.f32 %v267, %v562
        %v564 = vpop.f32.mrb[0].mxu0
        %565 = vmatprep.mubr.f32.mxu0 0.0
        %566 = vmatmul.mubr.f32.gmra.mrb[0].mxu0 %v352
        %v567 = vpop.f32.mrb[0].mxu0
        %v568 = vadd.f32 %v267, %v567
        %v569 = vpop.f32.mrb[0].mxu0
        %570 = vmatprep.mubr.f32.mxu0 0.0
        %571 = vmatmul.mubr.f32.gmra.mrb[0].mxu0 %v355
        %v572 = vpop.f32.mrb[0].mxu0
        %v573 = vadd.f32 %v267, %v572
        %v574 = vpop.f32.mrb[0].mxu0
        %575 = vmatprep.mubr.f32.mxu0 0.0
        %576 = vmatmul.mubr.f32.gmra.mrb[0].mxu0 %v358
        %v577 = vpop.f32.mrb[0].mxu0
        %v578 = vadd.f32 %v267, %v577
        %v579 = vpop.f32.mrb[0].mxu0
        %580 = vmatprep.mubr.f32.mxu0 0.0
        %581 = vmatmul.mubr.f32.gmra.mrb[0].mxu0 %v361
        %v582 = vpop.f32.mrb[0].mxu0
        %v583 = vadd.f32 %v267, %v582
        %v584 = vpop.f32.mrb[0].mxu0
        %585 = vmatprep.mubr.f32.mxu0 0.0
        %586 = vmatmul.mubr.f32.gmra.mrb[0].mxu0 %v364
        %v587 = vpop.f32.mrb[0].mxu0
        %v588 = vadd.f32 %v267, %v587
        %v589 = vpop.f32.mrb[0].mxu0
        %590 = vdwg.mxu0
        %v591 = vmax.f32 %v433, 0.0
        %v592 = vmax.f32 %v438, 0.0
        %v593 = vmax.f32 %v443, 0.0
        %v594 = vmax.f32 %v448, 0.0
        %v595 = vmax.f32 %v453, 0.0
        %v596 = vmax.f32 %v458, 0.0
        %v597 = vmax.f32 %v463, 0.0
        %v598 = vmax.f32 %v468, 0.0
        %v599 = vmax.f32 %v473, 0.0
        %v600 = vmax.f32 %v478, 0.0
        %v601 = vmax.f32 %v483, 0.0
        %v602 = vmax.f32 %v488, 0.0
        %v603 = vmax.f32 %v493, 0.0
        %v604 = vmax.f32 %v498, 0.0
        %v605 = vmax.f32 %v503, 0.0
        %v606 = vmax.f32 %v508, 0.0
        %v607 = vmax.f32 %v513, 0.0
        %v608 = vmax.f32 %v518, 0.0
        %v609 = vmax.f32 %v523, 0.0
        %v610 = vmax.f32 %v528, 0.0
        %v611 = vmax.f32 %v533, 0.0
        %v612 = vmax.f32 %v538, 0.0
        %v613 = vmax.f32 %v543, 0.0
        %v614 = vmax.f32 %v548, 0.0
        %v615 = vmax.f32 %v553, 0.0
        %v616 = vmax.f32 %v558, 0.0
        %v617 = vmax.f32 %v563, 0.0
        %v618 = vmax.f32 %v568, 0.0
        %v619 = vmax.f32 %v573, 0.0
        %v620 = vmax.f32 %v578, 0.0
        %v621 = vmax.f32 %v583, 0.0
        %v622 = vmax.f32 %v588, 0.0
        %v623 = vld [vmem:[%s3] sm:$0xff]
        %v624 = vld [vmem:[%s3 + $0x8] sm:$0xff]
        %v625 = vld [vmem:[%s3 + $0x10] sm:$0xff]
        %v626 = vld [vmem:[%s3 + $0x18] sm:$0xff]
        %v627 = vld [vmem:[%s4] sm:$0x1]
        %v629 = vlaneseq
        %v630 = vshrl.u32 %v629, 7
        %v631 = vsub.s32 0, %v630
        %v632 = vrot.slane %v627, %v631
        %v635 = vsel %vm269, %v591, 0
        %v638 = vsel %vm269, %v592, 0
        %v641 = vsel %vm269, %v593, 0
        %v644 = vsel %vm269, %v594, 0
        %v647 = vsel %vm269, %v595, 0
        %v650 = vsel %vm269, %v596, 0
        %v653 = vsel %vm269, %v597, 0
        %v656 = vsel %vm269, %v598, 0
        %v659 = vsel %vm269, %v599, 0
        %v662 = vsel %vm269, %v600, 0
        %v665 = vsel %vm269, %v601, 0
        %v668 = vsel %vm269, %v602, 0
        %v671 = vsel %vm269, %v603, 0
        %v674 = vsel %vm269, %v604, 0
        %v677 = vsel %vm269, %v605, 0
        %v680 = vsel %vm269, %v606, 0
        %v683 = vsel %vm269, %v607, 0
        %v686 = vsel %vm269, %v608, 0
        %v689 = vsel %vm269, %v609, 0
        %v692 = vsel %vm269, %v610, 0
        %v695 = vsel %vm269, %v611, 0
        %v698 = vsel %vm269, %v612, 0
        %v701 = vsel %vm269, %v613, 0
        %v704 = vsel %vm269, %v614, 0
        %v707 = vsel %vm269, %v615, 0
        %v710 = vsel %vm269, %v616, 0
        %v713 = vsel %vm269, %v617, 0
        %v716 = vsel %vm269, %v618, 0
        %v719 = vsel %vm269, %v619, 0
        %v722 = vsel %vm269, %v620, 0
        %v725 = vsel %vm269, %v621, 0
        %v728 = vsel %vm269, %v622, 0
        %730 = vmatprep.subr.mxu0 0.0
        %731 = vmatpush1.msra.mxu0 %v623
        %732 = vmatprep.subr.mxu0 0.0
        %733 = vmatpush1.msra.mxu0 %v624
        %734 = vmatprep.subr.mxu0 0.0
        %735 = vmatpush1.msra.mxu0 %v625
        %736 = vmatprep.subr.mxu0 0.0
        %737 = vmatpush1.msra.mxu0 %v626
        %738 = vmatprep.subr.mxu0 0.0
        %739 = vmatpush1.msra.mxu0 0.0
        %740 = vmatprep.subr.mxu0 0.0
        %741 = vmatpush1.msra.mxu0 0.0
        %742 = vmatprep.subr.mxu0 0.0
        %743 = vmatpush1.msra.mxu0 0.0
        %744 = vmatprep.subr.mxu0 0.0
        %745 = vmatpush1.msra.mxu0 0.0
        %746 = vmatprep.subr.mxu0 0.0
        %747 = vmatpush1.msra.mxu0 0.0
        %748 = vmatprep.subr.mxu0 0.0
        %749 = vmatpush1.msra.mxu0 0.0
        %750 = vmatprep.subr.mxu0 0.0
        %751 = vmatpush1.msra.mxu0 0.0
        %752 = vmatprep.subr.mxu0 0.0
        %753 = vmatpush1.msra.mxu0 0.0
        %754 = vmatprep.subr.mxu0 0.0
        %755 = vmatpush1.msra.mxu0 0.0
        %756 = vmatprep.subr.mxu0 0.0
        %757 = vmatpush1.msra.mxu0 0.0
        %758 = vmatprep.subr.mxu0 0.0
        %759 = vmatpush1.msra.mxu0 0.0
        %760 = vmatprep.subr.mxu0 0.0
        %761 = vmatpush1.msra.mxu0 0.0
        %762 = vmatprep.subr.mxu0 0.0
        %763 = vmatpush1.msra.mxu0 0.0
        %764 = vmatprep.subr.mxu0 0.0
        %765 = vmatpush1.msra.mxu0 0.0
        %766 = vmatprep.subr.mxu0 0.0
        %767 = vmatpush1.msra.mxu0 0.0
        %768 = vmatprep.subr.mxu0 0.0
        %769 = vmatpush1.msra.mxu0 0.0
        %770 = vmatprep.subr.mxu0 0.0
        %771 = vmatpush1.msra.mxu0 0.0
        %772 = vmatprep.subr.mxu0 0.0
        %773 = vmatpush1.msra.mxu0 0.0
        %774 = vmatprep.subr.mxu0 0.0
        %775 = vmatpush1.msra.mxu0 0.0
        %776 = vmatprep.subr.mxu0 0.0
        %777 = vmatpush1.msra.mxu0 0.0
        %778 = vmatprep.subr.mxu0 0.0
        %779 = vmatpush1.msra.mxu0 0.0
        %780 = vmatprep.subr.mxu0 0.0
        %781 = vmatpush1.msra.mxu0 0.0
        %782 = vmatprep.subr.mxu0 0.0
        %783 = vmatpush1.msra.mxu0 0.0
        %784 = vmatprep.subr.mxu0 0.0
        %785 = vmatpush1.msra.mxu0 0.0
        %786 = vmatprep.subr.mxu0 0.0
        %787 = vmatpush1.msra.mxu0 0.0
        %788 = vmatprep.subr.mxu0 0.0
        %789 = vmatpush1.msra.mxu0 0.0
        %790 = vmatprep.subr.mxu0 0.0
        %791 = vmatpush1.msra.mxu0 0.0
        %792 = vmatprep.subr.mxu0 0.0
        %793 = vmatpush1.msra.mxu0 0.0
        %794 = vmatprep.mubr.f32.mxu0 0.0
        %795 = vmatmul.mubr.f32.gmra.mrb[0].mxu0 %v635
        %v796 = vpop.f32.mrb[0].mxu0
        %v797 = vadd.f32 %v632, %v796
        %v798 = vpop.f32.mrb[0].mxu0
        %799 = vmatprep.mubr.f32.mxu0 0.0
        %800 = vmatmul.mubr.f32.gmra.mrb[0].mxu0 %v638
        %v801 = vpop.f32.mrb[0].mxu0
        %v802 = vadd.f32 %v632, %v801
        %v803 = vpop.f32.mrb[0].mxu0
        %804 = vmatprep.mubr.f32.mxu0 0.0
        %805 = vmatmul.mubr.f32.gmra.mrb[0].mxu0 %v641
        %v806 = vpop.f32.mrb[0].mxu0
        %v807 = vadd.f32 %v632, %v806
        %v808 = vpop.f32.mrb[0].mxu0
        %809 = vmatprep.mubr.f32.mxu0 0.0
        %810 = vmatmul.mubr.f32.gmra.mrb[0].mxu0 %v644
        %v811 = vpop.f32.mrb[0].mxu0
        %v812 = vadd.f32 %v632, %v811
        %v813 = vpop.f32.mrb[0].mxu0
        %814 = vmatprep.mubr.f32.mxu0 0.0
        %815 = vmatmul.mubr.f32.gmra.mrb[0].mxu0 %v647
        %v816 = vpop.f32.mrb[0].mxu0
        %v817 = vadd.f32 %v632, %v816
        %v818 = vpop.f32.mrb[0].mxu0
        %819 = vmatprep.mubr.f32.mxu0 0.0
        %820 = vmatmul.mubr.f32.gmra.mrb[0].mxu0 %v650
        %v821 = vpop.f32.mrb[0].mxu0
        %v822 = vadd.f32 %v632, %v821
        %v823 = vpop.f32.mrb[0].mxu0
        %824 = vmatprep.mubr.f32.mxu0 0.0
        %825 = vmatmul.mubr.f32.gmra.mrb[0].mxu0 %v653
        %v826 = vpop.f32.mrb[0].mxu0
        %v827 = vadd.f32 %v632, %v826
        %v828 = vpop.f32.mrb[0].mxu0
        %829 = vmatprep.mubr.f32.mxu0 0.0
        %830 = vmatmul.mubr.f32.gmra.mrb[0].mxu0 %v656
        %v831 = vpop.f32.mrb[0].mxu0
        %v832 = vadd.f32 %v632, %v831
        %v833 = vpop.f32.mrb[0].mxu0
        %834 = vmatprep.mubr.f32.mxu0 0.0
        %835 = vmatmul.mubr.f32.gmra.mrb[0].mxu0 %v659
        %v836 = vpop.f32.mrb[0].mxu0
        %v837 = vadd.f32 %v632, %v836
        %v838 = vpop.f32.mrb[0].mxu0
        %839 = vmatprep.mubr.f32.mxu0 0.0
        %840 = vmatmul.mubr.f32.gmra.mrb[0].mxu0 %v662
        %v841 = vpop.f32.mrb[0].mxu0
        %v842 = vadd.f32 %v632, %v841
        %v843 = vpop.f32.mrb[0].mxu0
        %844 = vmatprep.mubr.f32.mxu0 0.0
        %845 = vmatmul.mubr.f32.gmra.mrb[0].mxu0 %v665
        %v846 = vpop.f32.mrb[0].mxu0
        %v847 = vadd.f32 %v632, %v846
        %v848 = vpop.f32.mrb[0].mxu0
        %849 = vmatprep.mubr.f32.mxu0 0.0
        %850 = vmatmul.mubr.f32.gmra.mrb[0].mxu0 %v668
        %v851 = vpop.f32.mrb[0].mxu0
        %v852 = vadd.f32 %v632, %v851
        %v853 = vpop.f32.mrb[0].mxu0
        %854 = vmatprep.mubr.f32.mxu0 0.0
        %855 = vmatmul.mubr.f32.gmra.mrb[0].mxu0 %v671
        %v856 = vpop.f32.mrb[0].mxu0
        %v857 = vadd.f32 %v632, %v856
        %v858 = vpop.f32.mrb[0].mxu0
        %859 = vmatprep.mubr.f32.mxu0 0.0
        %860 = vmatmul.mubr.f32.gmra.mrb[0].mxu0 %v674
        %v861 = vpop.f32.mrb[0].mxu0
        %v862 = vadd.f32 %v632, %v861
        %v863 = vpop.f32.mrb[0].mxu0
        %864 = vmatprep.mubr.f32.mxu0 0.0
        %865 = vmatmul.mubr.f32.gmra.mrb[0].mxu0 %v677
        %v866 = vpop.f32.mrb[0].mxu0
        %v867 = vadd.f32 %v632, %v866
        %v868 = vpop.f32.mrb[0].mxu0
        %869 = vmatprep.mubr.f32.mxu0 0.0
        %870 = vmatmul.mubr.f32.gmra.mrb[0].mxu0 %v680
        %v871 = vpop.f32.mrb[0].mxu0
        %v872 = vadd.f32 %v632, %v871
        %v873 = vpop.f32.mrb[0].mxu0
        %874 = vmatprep.mubr.f32.mxu0 0.0
        %875 = vmatmul.mubr.f32.gmra.mrb[0].mxu0 %v683
        %v876 = vpop.f32.mrb[0].mxu0
        %v877 = vadd.f32 %v632, %v876
        %v878 = vpop.f32.mrb[0].mxu0
        %879 = vmatprep.mubr.f32.mxu0 0.0
        %880 = vmatmul.mubr.f32.gmra.mrb[0].mxu0 %v686
        %v881 = vpop.f32.mrb[0].mxu0
        %v882 = vadd.f32 %v632, %v881
        %v883 = vpop.f32.mrb[0].mxu0
        %884 = vmatprep.mubr.f32.mxu0 0.0
        %885 = vmatmul.mubr.f32.gmra.mrb[0].mxu0 %v689
        %v886 = vpop.f32.mrb[0].mxu0
        %v887 = vadd.f32 %v632, %v886
        %v888 = vpop.f32.mrb[0].mxu0
        %889 = vmatprep.mubr.f32.mxu0 0.0
        %890 = vmatmul.mubr.f32.gmra.mrb[0].mxu0 %v692
        %v891 = vpop.f32.mrb[0].mxu0
        %v892 = vadd.f32 %v632, %v891
        %v893 = vpop.f32.mrb[0].mxu0
        %894 = vmatprep.mubr.f32.mxu0 0.0
        %895 = vmatmul.mubr.f32.gmra.mrb[0].mxu0 %v695
        %v896 = vpop.f32.mrb[0].mxu0
        %v897 = vadd.f32 %v632, %v896
        %v898 = vpop.f32.mrb[0].mxu0
        %899 = vmatprep.mubr.f32.mxu0 0.0
        %900 = vmatmul.mubr.f32.gmra.mrb[0].mxu0 %v698
        %v901 = vpop.f32.mrb[0].mxu0
        %v902 = vadd.f32 %v632, %v901
        %v903 = vpop.f32.mrb[0].mxu0
        %904 = vmatprep.mubr.f32.mxu0 0.0
        %905 = vmatmul.mubr.f32.gmra.mrb[0].mxu0 %v701
        %v906 = vpop.f32.mrb[0].mxu0
        %v907 = vadd.f32 %v632, %v906
        %v908 = vpop.f32.mrb[0].mxu0
        %909 = vmatprep.mubr.f32.mxu0 0.0
        %910 = vmatmul.mubr.f32.gmra.mrb[0].mxu0 %v704
        %v911 = vpop.f32.mrb[0].mxu0
        %v912 = vadd.f32 %v632, %v911
        %v913 = vpop.f32.mrb[0].mxu0
        %914 = vmatprep.mubr.f32.mxu0 0.0
        %915 = vmatmul.mubr.f32.gmra.mrb[0].mxu0 %v707
        %v916 = vpop.f32.mrb[0].mxu0
        %v917 = vadd.f32 %v632, %v916
        %v918 = vpop.f32.mrb[0].mxu0
        %919 = vmatprep.mubr.f32.mxu0 0.0
        %920 = vmatmul.mubr.f32.gmra.mrb[0].mxu0 %v710
        %v921 = vpop.f32.mrb[0].mxu0
        %v922 = vadd.f32 %v632, %v921
        %v923 = vpop.f32.mrb[0].mxu0
        %924 = vmatprep.mubr.f32.mxu0 0.0
        %925 = vmatmul.mubr.f32.gmra.mrb[0].mxu0 %v713
        %v926 = vpop.f32.mrb[0].mxu0
        %v927 = vadd.f32 %v632, %v926
        %v928 = vpop.f32.mrb[0].mxu0
        %929 = vmatprep.mubr.f32.mxu0 0.0
        %930 = vmatmul.mubr.f32.gmra.mrb[0].mxu0 %v716
        %v931 = vpop.f32.mrb[0].mxu0
        %v932 = vadd.f32 %v632, %v931
        %v933 = vpop.f32.mrb[0].mxu0
        %934 = vmatprep.mubr.f32.mxu0 0.0
        %935 = vmatmul.mubr.f32.gmra.mrb[0].mxu0 %v719
        %v936 = vpop.f32.mrb[0].mxu0
        %v937 = vadd.f32 %v632, %v936
        %v938 = vpop.f32.mrb[0].mxu0
        %939 = vmatprep.mubr.f32.mxu0 0.0
        %940 = vmatmul.mubr.f32.gmra.mrb[0].mxu0 %v722
        %v941 = vpop.f32.mrb[0].mxu0
        %v942 = vadd.f32 %v632, %v941
        %v943 = vpop.f32.mrb[0].mxu0
        %944 = vmatprep.mubr.f32.mxu0 0.0
        %945 = vmatmul.mubr.f32.gmra.mrb[0].mxu0 %v725
        %v946 = vpop.f32.mrb[0].mxu0
        %v947 = vadd.f32 %v632, %v946
        %v948 = vpop.f32.mrb[0].mxu0
        %949 = vmatprep.mubr.f32.mxu0 0.0
        %950 = vmatmul.mubr.f32.gmra.mrb[0].mxu0 %v728
        %v951 = vpop.f32.mrb[0].mxu0
        %v952 = vadd.f32 %v632, %v951
        %v953 = vpop.f32.mrb[0].mxu0
        %954 = vdwg.mxu0
        %955 = vmax.xlane.f32.xlu0 %v797
        %v956 = vpop.xlane.xlu0 %955
        %957 = vmax.xlane.f32.xlu0 %v802
        %v958 = vpop.xlane.xlu0 %957
        %959 = vmax.xlane.f32.xlu0 %v807
        %v960 = vpop.xlane.xlu0 %959
        %961 = vmax.xlane.f32.xlu0 %v812
        %v962 = vpop.xlane.xlu0 %961
        %963 = vmax.xlane.f32.xlu0 %v817
        %v964 = vpop.xlane.xlu0 %963
        %965 = vmax.xlane.f32.xlu0 %v822
        %v966 = vpop.xlane.xlu0 %965
        %967 = vmax.xlane.f32.xlu0 %v827
        %v968 = vpop.xlane.xlu0 %967
        %969 = vmax.xlane.f32.xlu0 %v832
        %v970 = vpop.xlane.xlu0 %969
        %971 = vmax.xlane.f32.xlu0 %v837
        %v972 = vpop.xlane.xlu0 %971
        %973 = vmax.xlane.f32.xlu0 %v842
        %v974 = vpop.xlane.xlu0 %973
        %975 = vmax.xlane.f32.xlu0 %v847
        %v976 = vpop.xlane.xlu0 %975
        %977 = vmax.xlane.f32.xlu0 %v852
        %v978 = vpop.xlane.xlu0 %977
        %979 = vmax.xlane.f32.xlu0 %v857
        %v980 = vpop.xlane.xlu0 %979
        %981 = vmax.xlane.f32.xlu0 %v862
        %v982 = vpop.xlane.xlu0 %981
        %983 = vmax.xlane.f32.xlu0 %v867
        %v984 = vpop.xlane.xlu0 %983
        %985 = vmax.xlane.f32.xlu0 %v872
        %v986 = vpop.xlane.xlu0 %985
        %987 = vmax.xlane.f32.xlu0 %v877
        %v988 = vpop.xlane.xlu0 %987
        %989 = vmax.xlane.f32.xlu0 %v882
        %v990 = vpop.xlane.xlu0 %989
        %991 = vmax.xlane.f32.xlu0 %v887
        %v992 = vpop.xlane.xlu0 %991
        %993 = vmax.xlane.f32.xlu0 %v892
        %v994 = vpop.xlane.xlu0 %993
        %995 = vmax.xlane.f32.xlu0 %v897
        %v996 = vpop.xlane.xlu0 %995
        %997 = vmax.xlane.f32.xlu0 %v902
        %v998 = vpop.xlane.xlu0 %997
        %999 = vmax.xlane.f32.xlu0 %v907
        %v1000 = vpop.xlane.xlu0 %999
        %1001 = vmax.xlane.f32.xlu0 %v912
        %v1002 = vpop.xlane.xlu0 %1001
        %1003 = vmax.xlane.f32.xlu0 %v917
        %v1004 = vpop.xlane.xlu0 %1003
        %1005 = vmax.xlane.f32.xlu0 %v922
        %v1006 = vpop.xlane.xlu0 %1005
        %1007 = vmax.xlane.f32.xlu0 %v927
        %v1008 = vpop.xlane.xlu0 %1007
        %1009 = vmax.xlane.f32.xlu0 %v932
        %v1010 = vpop.xlane.xlu0 %1009
        %1011 = vmax.xlane.f32.xlu0 %v937
        %v1012 = vpop.xlane.xlu0 %1011
        %1013 = vmax.xlane.f32.xlu0 %v942
        %v1014 = vpop.xlane.xlu0 %1013
        %1015 = vmax.xlane.f32.xlu0 %v947
        %v1016 = vpop.xlane.xlu0 %1015
        %1017 = vmax.xlane.f32.xlu0 %v952
        %v1018 = vpop.xlane.xlu0 %1017
        %v1019 = vsub.f32 %v797, %v956
        %v1020 = vsub.f32 %v802, %v958
        %v1021 = vsub.f32 %v807, %v960
        %v1022 = vsub.f32 %v812, %v962
        %v1023 = vsub.f32 %v817, %v964
        %v1024 = vsub.f32 %v822, %v966
        %v1025 = vsub.f32 %v827, %v968
        %v1026 = vsub.f32 %v832, %v970
        %v1027 = vsub.f32 %v837, %v972
        %v1028 = vsub.f32 %v842, %v974
        %v1029 = vsub.f32 %v847, %v976
        %v1030 = vsub.f32 %v852, %v978
        %v1031 = vsub.f32 %v857, %v980
        %v1032 = vsub.f32 %v862, %v982
        %v1033 = vsub.f32 %v867, %v984
        %v1034 = vsub.f32 %v872, %v986
        %v1035 = vsub.f32 %v877, %v988
        %v1036 = vsub.f32 %v882, %v990
        %v1037 = vsub.f32 %v887, %v992
        %v1038 = vsub.f32 %v892, %v994
        %v1039 = vsub.f32 %v897, %v996
        %v1040 = vsub.f32 %v902, %v998
        %v1041 = vsub.f32 %v907, %v1000
        %v1042 = vsub.f32 %v912, %v1002
        %v1043 = vsub.f32 %v917, %v1004
        %v1044 = vsub.f32 %v922, %v1006
        %v1045 = vsub.f32 %v927, %v1008
        %v1046 = vsub.f32 %v932, %v1010
        %v1047 = vsub.f32 %v937, %v1012
        %v1048 = vsub.f32 %v942, %v1014
        %v1049 = vsub.f32 %v947, %v1016
        %v1050 = vsub.f32 %v952, %v1018
        %v1051 = vmul.f32 %v1019, 1.442695
        %v1052 = vpow.pop %v1051
        %v1053 = vmul.f32 %v1020, 1.442695
        %v1054 = vpow.pop %v1053
        %v1055 = vmul.f32 %v1021, 1.442695
        %v1056 = vpow.pop %v1055
        %v1057 = vmul.f32 %v1022, 1.442695
        %v1058 = vpow.pop %v1057
        %v1059 = vmul.f32 %v1023, 1.442695
        %v1060 = vpow.pop %v1059
        %v1061 = vmul.f32 %v1024, 1.442695
        %v1062 = vpow.pop %v1061
        %v1063 = vmul.f32 %v1025, 1.442695
        %v1064 = vpow.pop %v1063
        %v1065 = vmul.f32 %v1026, 1.442695
        %v1066 = vpow.pop %v1065
        %v1067 = vmul.f32 %v1027, 1.442695
        %v1068 = vpow.pop %v1067
        %v1069 = vmul.f32 %v1028, 1.442695
        %v1070 = vpow.pop %v1069
        %v1071 = vmul.f32 %v1029, 1.442695
        %v1072 = vpow.pop %v1071
        %v1073 = vmul.f32 %v1030, 1.442695
        %v1074 = vpow.pop %v1073
        %v1075 = vmul.f32 %v1031, 1.442695
        %v1076 = vpow.pop %v1075
        %v1077 = vmul.f32 %v1032, 1.442695
        %v1078 = vpow.pop %v1077
        %v1079 = vmul.f32 %v1033, 1.442695
        %v1080 = vpow.pop %v1079
        %v1081 = vmul.f32 %v1034, 1.442695
        %v1082 = vpow.pop %v1081
        %v1083 = vmul.f32 %v1035, 1.442695
        %v1084 = vpow.pop %v1083
        %v1085 = vmul.f32 %v1036, 1.442695
        %v1086 = vpow.pop %v1085
        %v1087 = vmul.f32 %v1037, 1.442695
        %v1088 = vpow.pop %v1087
        %v1089 = vmul.f32 %v1038, 1.442695
        %v1090 = vpow.pop %v1089
        %v1091 = vmul.f32 %v1039, 1.442695
        %v1092 = vpow.pop %v1091
        %v1093 = vmul.f32 %v1040, 1.442695
        %v1094 = vpow.pop %v1093
        %v1095 = vmul.f32 %v1041, 1.442695
        %v1096 = vpow.pop %v1095
        %v1097 = vmul.f32 %v1042, 1.442695
        %v1098 = vpow.pop %v1097
        %v1099 = vmul.f32 %v1043, 1.442695
        %v1100 = vpow.pop %v1099
        %v1101 = vmul.f32 %v1044, 1.442695
        %v1102 = vpow.pop %v1101
        %v1103 = vmul.f32 %v1045, 1.442695
        %v1104 = vpow.pop %v1103
        %v1105 = vmul.f32 %v1046, 1.442695
        %v1106 = vpow.pop %v1105
        %v1107 = vmul.f32 %v1047, 1.442695
        %v1108 = vpow.pop %v1107
        %v1109 = vmul.f32 %v1048, 1.442695
        %v1110 = vpow.pop %v1109
        %v1111 = vmul.f32 %v1049, 1.442695
        %v1112 = vpow.pop %v1111
        %v1113 = vmul.f32 %v1050, 1.442695
        %v1114 = vpow.pop %v1113
        %1115 = vadd.xlane.f32.xlu0 %v1052
        %v1116 = vpop.xlane.xlu0 %1115
        %1117 = vadd.xlane.f32.xlu0 %v1054
        %v1118 = vpop.xlane.xlu0 %1117
        %1119 = vadd.xlane.f32.xlu0 %v1056
        %v1120 = vpop.xlane.xlu0 %1119
        %1121 = vadd.xlane.f32.xlu0 %v1058
        %v1122 = vpop.xlane.xlu0 %1121
        %1123 = vadd.xlane.f32.xlu0 %v1060
        %v1124 = vpop.xlane.xlu0 %1123
        %1125 = vadd.xlane.f32.xlu0 %v1062
        %v1126 = vpop.xlane.xlu0 %1125
        %1127 = vadd.xlane.f32.xlu0 %v1064
        %v1128 = vpop.xlane.xlu0 %1127
        %1129 = vadd.xlane.f32.xlu0 %v1066
        %v1130 = vpop.xlane.xlu0 %1129
        %1131 = vadd.xlane.f32.xlu0 %v1068
        %v1132 = vpop.xlane.xlu0 %1131
        %1133 = vadd.xlane.f32.xlu0 %v1070
        %v1134 = vpop.xlane.xlu0 %1133
        %1135 = vadd.xlane.f32.xlu0 %v1072
        %v1136 = vpop.xlane.xlu0 %1135
        %1137 = vadd.xlane.f32.xlu0 %v1074
        %v1138 = vpop.xlane.xlu0 %1137
        %1139 = vadd.xlane.f32.xlu0 %v1076
        %v1140 = vpop.xlane.xlu0 %1139
        %1141 = vadd.xlane.f32.xlu0 %v1078
        %v1142 = vpop.xlane.xlu0 %1141
        %1143 = vadd.xlane.f32.xlu0 %v1080
        %v1144 = vpop.xlane.xlu0 %1143
        %1145 = vadd.xlane.f32.xlu0 %v1082
        %v1146 = vpop.xlane.xlu0 %1145
        %1147 = vadd.xlane.f32.xlu0 %v1084
        %v1148 = vpop.xlane.xlu0 %1147
        %1149 = vadd.xlane.f32.xlu0 %v1086
        %v1150 = vpop.xlane.xlu0 %1149
        %1151 = vadd.xlane.f32.xlu0 %v1088
        %v1152 = vpop.xlane.xlu0 %1151
        %1153 = vadd.xlane.f32.xlu0 %v1090
        %v1154 = vpop.xlane.xlu0 %1153
        %1155 = vadd.xlane.f32.xlu0 %v1092
        %v1156 = vpop.xlane.xlu0 %1155
        %1157 = vadd.xlane.f32.xlu0 %v1094
        %v1158 = vpop.xlane.xlu0 %1157
        %1159 = vadd.xlane.f32.xlu0 %v1096
        %v1160 = vpop.xlane.xlu0 %1159
        %1161 = vadd.xlane.f32.xlu0 %v1098
        %v1162 = vpop.xlane.xlu0 %1161
        %1163 = vadd.xlane.f32.xlu0 %v1100
        %v1164 = vpop.xlane.xlu0 %1163
        %1165 = vadd.xlane.f32.xlu0 %v1102
        %v1166 = vpop.xlane.xlu0 %1165
        %1167 = vadd.xlane.f32.xlu0 %v1104
        %v1168 = vpop.xlane.xlu0 %1167
        %1169 = vadd.xlane.f32.xlu0 %v1106
        %v1170 = vpop.xlane.xlu0 %1169
        %1171 = vadd.xlane.f32.xlu0 %v1108
        %v1172 = vpop.xlane.xlu0 %1171
        %1173 = vadd.xlane.f32.xlu0 %v1110
        %v1174 = vpop.xlane.xlu0 %1173
        %1175 = vadd.xlane.f32.xlu0 %v1112
        %v1176 = vpop.xlane.xlu0 %1175
        %1177 = vadd.xlane.f32.xlu0 %v1114
        %v1178 = vpop.xlane.xlu0 %1177
        %v1179 = vlog2.pop %v1116
        %v1180 = vmul.f32 %v1179, 0.6931472
        %v1181 = vlog2.pop %v1118
        %v1182 = vmul.f32 %v1181, 0.6931472
        %v1183 = vlog2.pop %v1120
        %v1184 = vmul.f32 %v1183, 0.6931472
        %v1185 = vlog2.pop %v1122
        %v1186 = vmul.f32 %v1185, 0.6931472
        %v1187 = vlog2.pop %v1124
        %v1188 = vmul.f32 %v1187, 0.6931472
        %v1189 = vlog2.pop %v1126
        %v1190 = vmul.f32 %v1189, 0.6931472
        %v1191 = vlog2.pop %v1128
        %v1192 = vmul.f32 %v1191, 0.6931472
        %v1193 = vlog2.pop %v1130
        %v1194 = vmul.f32 %v1193, 0.6931472
        %v1195 = vlog2.pop %v1132
        %v1196 = vmul.f32 %v1195, 0.6931472
        %v1197 = vlog2.pop %v1134
        %v1198 = vmul.f32 %v1197, 0.6931472
        %v1199 = vlog2.pop %v1136
        %v1200 = vmul.f32 %v1199, 0.6931472
        %v1201 = vlog2.pop %v1138
        %v1202 = vmul.f32 %v1201, 0.6931472
        %v1203 = vlog2.pop %v1140
        %v1204 = vmul.f32 %v1203, 0.6931472
        %v1205 = vlog2.pop %v1142
        %v1206 = vmul.f32 %v1205, 0.6931472
        %v1207 = vlog2.pop %v1144
        %v1208 = vmul.f32 %v1207, 0.6931472
        %v1209 = vlog2.pop %v1146
        %v1210 = vmul.f32 %v1209, 0.6931472
        %v1211 = vlog2.pop %v1148
        %v1212 = vmul.f32 %v1211, 0.6931472
        %v1213 = vlog2.pop %v1150
        %v1214 = vmul.f32 %v1213, 0.6931472
        %v1215 = vlog2.pop %v1152
        %v1216 = vmul.f32 %v1215, 0.6931472
        %v1217 = vlog2.pop %v1154
        %v1218 = vmul.f32 %v1217, 0.6931472
        %v1219 = vlog2.pop %v1156
        %v1220 = vmul.f32 %v1219, 0.6931472
        %v1221 = vlog2.pop %v1158
        %v1222 = vmul.f32 %v1221, 0.6931472
        %v1223 = vlog2.pop %v1160
        %v1224 = vmul.f32 %v1223, 0.6931472
        %v1225 = vlog2.pop %v1162
        %v1226 = vmul.f32 %v1225, 0.6931472
        %v1227 = vlog2.pop %v1164
        %v1228 = vmul.f32 %v1227, 0.6931472
        %v1229 = vlog2.pop %v1166
        %v1230 = vmul.f32 %v1229, 0.6931472
        %v1231 = vlog2.pop %v1168
        %v1232 = vmul.f32 %v1231, 0.6931472
        %v1233 = vlog2.pop %v1170
        %v1234 = vmul.f32 %v1233, 0.6931472
        %v1235 = vlog2.pop %v1172
        %v1236 = vmul.f32 %v1235, 0.6931472
        %v1237 = vlog2.pop %v1174
        %v1238 = vmul.f32 %v1237, 0.6931472
        %v1239 = vlog2.pop %v1176
        %v1240 = vmul.f32 %v1239, 0.6931472
        %v1241 = vlog2.pop %v1178
        %v1242 = vmul.f32 %v1241, 0.6931472
        %v1243 = vsub.f32 %v1019, %v1180
        %v1244 = vsub.f32 %v1020, %v1182
        %v1245 = vsub.f32 %v1021, %v1184
        %v1246 = vsub.f32 %v1022, %v1186
        %v1247 = vsub.f32 %v1023, %v1188
        %v1248 = vsub.f32 %v1024, %v1190
        %v1249 = vsub.f32 %v1025, %v1192
        %v1250 = vsub.f32 %v1026, %v1194
        %v1251 = vsub.f32 %v1027, %v1196
        %v1252 = vsub.f32 %v1028, %v1198
        %v1253 = vsub.f32 %v1029, %v1200
        %v1254 = vsub.f32 %v1030, %v1202
        %v1255 = vsub.f32 %v1031, %v1204
        %v1256 = vsub.f32 %v1032, %v1206
        %v1257 = vsub.f32 %v1033, %v1208
        %v1258 = vsub.f32 %v1034, %v1210
        %v1259 = vsub.f32 %v1035, %v1212
        %v1260 = vsub.f32 %v1036, %v1214
        %v1261 = vsub.f32 %v1037, %v1216
        %v1262 = vsub.f32 %v1038, %v1218
        %v1263 = vsub.f32 %v1039, %v1220
        %v1264 = vsub.f32 %v1040, %v1222
        %v1265 = vsub.f32 %v1041, %v1224
        %v1266 = vsub.f32 %v1042, %v1226
        %v1267 = vsub.f32 %v1043, %v1228
        %v1268 = vsub.f32 %v1044, %v1230
        %v1269 = vsub.f32 %v1045, %v1232
        %v1270 = vsub.f32 %v1046, %v1234
        %v1271 = vsub.f32 %v1047, %v1236
        %v1272 = vsub.f32 %v1048, %v1238
        %v1273 = vsub.f32 %v1049, %v1240
        %v1274 = vsub.f32 %v1050, %v1242
        %1275 = vst [vmem:[%s218] sm:$0xff] %v1243
        %1276 = vst [vmem:[%s218 + $0x8] sm:$0xff] %v1244
        %1277 = vst [vmem:[%s218 + $0x10] sm:$0xff] %v1245
        %1278 = vst [vmem:[%s218 + $0x18] sm:$0xff] %v1246
        %1279 = vst [vmem:[%s218 + $0x20] sm:$0xff] %v1247
        %1280 = vst [vmem:[%s218 + $0x28] sm:$0xff] %v1248
        %1281 = vst [vmem:[%s218 + $0x30] sm:$0xff] %v1249
        %1282 = vst [vmem:[%s218 + $0x38] sm:$0xff] %v1250
        %1283 = vst [vmem:[%s218 + $0x40] sm:$0xff] %v1251
        %1284 = vst [vmem:[%s218 + $0x48] sm:$0xff] %v1252
        %1285 = vst [vmem:[%s218 + $0x50] sm:$0xff] %v1253
        %1286 = vst [vmem:[%s218 + $0x58] sm:$0xff] %v1254
        %1287 = vst [vmem:[%s218 + $0x60] sm:$0xff] %v1255
        %1288 = vst [vmem:[%s218 + $0x68] sm:$0xff] %v1256
        %1289 = vst [vmem:[%s218 + $0x70] sm:$0xff] %v1257
        %1290 = vst [vmem:[%s218 + $0x78] sm:$0xff] %v1258
        %1291 = vst [vmem:[%s218 + $0x80] sm:$0xff] %v1259
        %1292 = vst [vmem:[%s218 + $0x88] sm:$0xff] %v1260
        %1293 = vst [vmem:[%s218 + $0x90] sm:$0xff] %v1261
        %1294 = vst [vmem:[%s218 + $0x98] sm:$0xff] %v1262
        %1295 = vst [vmem:[%s218 + $0xa0] sm:$0xff] %v1263
        %1296 = vst [vmem:[%s218 + $0xa8] sm:$0xff] %v1264
        %1297 = vst [vmem:[%s218 + $0xb0] sm:$0xff] %v1265
        %1298 = vst [vmem:[%s218 + $0xb8] sm:$0xff] %v1266
        %1299 = vst [vmem:[%s218 + $0xc0] sm:$0xff] %v1267
        %1300 = vst [vmem:[%s218 + $0xc8] sm:$0xff] %v1268
        %1301 = vst [vmem:[%s218 + $0xd0] sm:$0xff] %v1269
        %1302 = vst [vmem:[%s218 + $0xd8] sm:$0xff] %v1270
        %1303 = vst [vmem:[%s218 + $0xe0] sm:$0xff] %v1271
        %1304 = vst [vmem:[%s218 + $0xe8] sm:$0xff] %v1272
        %1305 = vst [vmem:[%s218 + $0xf0] sm:$0xff] %v1273
        %1306 = vst [vmem:[%s218 + $0xf8] sm:$0xff] %v1274
        %s1307 = sand.u32 %s137, 1
        %s1308 = scalar_lea.sflag [#allocation3], %s1307
        %s1309 = sand.u32 %s137, 1
        %s1310 = smul.addr %s1309, 256
        %s1311 = scalar_lea.vmem [#allocation2], %s1310
        // Predicated region
        $region41: #{tpu_custom_call.1} parent=39 // pred_check
          %p1312 = pneg %p147
        $region42: #{tpu_custom_call.1} parent=39 // pred_check_branch
          %1314 = sbr.rel (%p1312) target = $region44
        $region43: #{tpu_custom_call.1} parent=39 // pred_region
          %s1315 = smul.u32 32, %s19
          %s1317 = ssub.s32 4096, 4096
          %1318 = vsyncadd %s1308, %s1317
          %s1319 = smul.addr %s1315, 128
          %s1320 = scalar_lea.hbm %s5, %s1319
          %s1321 = sshll.u32 %s1311, 4
          %s1322 = int_to_ptr.vmem [resolvable:$true] %s1321
          %1327 = dma.vmem_to_hbm [thread:$0]  %s1322, 4096, %s1320, %s1308, 128, 128, 8
        $region44: #{tpu_custom_call.1} parent=39 // pred_fallthru
          _
      $region40: #{tpu_custom_call.1} parent=5 // pred_fallthru
        _
      %p1328 = scmp.le.s32.totalorder 2, %s14
      // Predicated region
      $region45: #{tpu_custom_call.1} parent=5 // pred_check
        %p1329 = pneg %p1328
      $region46: #{tpu_custom_call.1} parent=5 // pred_check_branch
        %1331 = sbr.rel (%p1329) target = $region48
      $region47: #{tpu_custom_call.1} parent=5 // pred_region
        %s1332 = ssub.s32 %s14, 2
        // Predicated region
        $region49: #{tpu_custom_call.1} parent=47 // pred_check
          %p1333 = pneg %p153
        $region50: #{tpu_custom_call.1} parent=47 // pred_check_branch
          %1335 = sbr.rel (%p1333) target = $region52
        $region51: #{tpu_custom_call.1} parent=47 // pred_region
          %s1336 = sand.u32 %s138, 1
          %s1337 = scalar_lea.sflag [#allocation3], %s1336
          %s1338 = sand.u32 %s138, 1
          %s1339 = smul.addr %s1338, 256
          %s1340 = scalar_lea.vmem [#allocation2], %s1339
          %1341 = dma.done %s1337, 4096
        $region52: #{tpu_custom_call.1} parent=47 // pred_fallthru
          _
      $region48: #{tpu_custom_call.1} parent=5 // pred_fallthru
        _
    $region6: #{tpu_custom_call.1} parent=1 // loop_footer
      %s18 = sadd.s32 1, %s14
    $region7: #{tpu_custom_call.1} parent=1 // loop_footer_branch
      %13 = sbr.rel target = $region3
    $region8: #{tpu_custom_call.1} parent=1 // loop_exit
      _
    %1342 = vsyncpa [#allocation3], 1
    %s1343 = scalar_lea.sflag [#allocation3], 1
    %1344 = vsyncpa %s1343, 1

</llo_original>
